<compile_context>
chip_gen: v6e
topology: v6e:2x2x1
jax: 0.10.0
libtpu: 0.0.40
codegen_flags: <defaults>
</compile_context>

<pallas_src>
import jax
import jax.numpy as jnp
from jax.experimental import pallas as pl
from jax.experimental.pallas import tpu as pltpu


def _fused_add_kernel(x_ref, w0_ref, w1_ref, w2_ref, w3_ref, o_ref):
    # Single fused elementwise VPU chain over the fully-resident tiles.
    # w2 is (1, 12, 1) and broadcasts along the lane axis in-kernel.
    o_ref[...] = (
        x_ref[...]
        + w0_ref[...]
        + w1_ref[...]
        + jnp.float32(0.22)
        + w2_ref[...] * jnp.float32(0.1)
        - w3_ref[...] * jnp.float32(0.5)
    )


def _model_forward(x, w0, w1, w2, w3):
    vmem = pl.BlockSpec(memory_space=pltpu.MemorySpace.VMEM)
    n_elem = x.size  # 624
    return pl.pallas_call(
        _fused_add_kernel,
        out_shape=jax.ShapeDtypeStruct(x.shape, x.dtype),
        in_specs=[vmem, vmem, vmem, vmem, vmem],
        out_specs=vmem,
        input_output_aliases={0: 0},  # reuse donated x buffer for the output
        cost_estimate=pl.CostEstimate(
            flops=5 * n_elem,
            transcendentals=0,
            bytes_accessed=4 * (4 * n_elem + 12 + n_elem),  # 4 full ins + w2 + out
        ),
    )(x, w0, w1, w2, w3)


# Donate x so the input/output alias is actually honored by XLA.
# Callers must NOT reuse x after calling model_forward.
model_forward = jax.jit(_model_forward, donate_argnums=0)


if __name__ == "__main__":
    key = jax.random.PRNGKey(0)
    kx, k0, k1, k2, k3 = jax.random.split(key, 5)

    # Parameters: deterministic uniform [0, 1), same shapes as the nn.Parameters.
    w0 = jax.random.uniform(k0, (1, 12, 52), dtype=jnp.float32)
    w1 = jax.random.uniform(k1, (1, 12, 52), dtype=jnp.float32)
    w2 = jax.random.uniform(k2, (1, 12, 1), dtype=jnp.float32)
    w3 = jax.random.uniform(k3, (1, 12, 52), dtype=jnp.float32)

    # Input consistent with the broadcasted parameter shapes: (1, 12, 52).
    x = jax.random.uniform(kx, (1, 12, 52), dtype=jnp.float32)

    # Pure-JAX reference, computed BEFORE the call (x is donated to the kernel).
    b_ref = w0 + w1 + 0.22 + w2 * 0.1
    ref = x + b_ref - w3 / 2
    ref = jax.block_until_ready(ref)

    out = model_forward(x, w0, w1, w2, w3)
    out = jax.block_until_ready(out)

    assert out.shape == (1, 12, 52)
    assert jnp.allclose(out, ref, atol=1e-6), "mismatch vs reference"

    print("KERNEL_OK")
</pallas_src>

<mosaic_0001>
module attributes {stable_mosaic.version = 11 : i64} {
  func.func @_fused_add_kernel(%arg0: memref<1x12x52xf32, #tpu.memory_space<vmem>>, %arg1: memref<1x12x52xf32, #tpu.memory_space<vmem>>, %arg2: memref<1x12x52xf32, #tpu.memory_space<vmem>>, %arg3: memref<1x12x1xf32, #tpu.memory_space<vmem>>, %arg4: memref<1x12x52xf32, #tpu.memory_space<vmem>>, %arg5: memref<1x12x52xf32, #tpu.memory_space<vmem>>) attributes {dimension_semantics = [], scalar_prefetch = 0 : i64, scratch_operands = 0 : i64, tpu.core_type = #tpu.core_type<tc>} {
    %c0 = arith.constant 0 : index
    %c0_0 = arith.constant 0 : index
    %c0_1 = arith.constant 0 : index
    %0 = vector.load %arg0[%c0, %c0_0, %c0_1] : memref<1x12x52xf32, #tpu.memory_space<vmem>>, vector<1x12x52xf32>
    %c0_2 = arith.constant 0 : index
    %c0_3 = arith.constant 0 : index
    %c0_4 = arith.constant 0 : index
    %1 = vector.load %arg1[%c0_2, %c0_3, %c0_4] : memref<1x12x52xf32, #tpu.memory_space<vmem>>, vector<1x12x52xf32>
    %2 = arith.addf %0, %1 : vector<1x12x52xf32>
    %c0_5 = arith.constant 0 : index
    %c0_6 = arith.constant 0 : index
    %c0_7 = arith.constant 0 : index
    %3 = vector.load %arg2[%c0_5, %c0_6, %c0_7] : memref<1x12x52xf32, #tpu.memory_space<vmem>>, vector<1x12x52xf32>
    %4 = arith.addf %2, %3 : vector<1x12x52xf32>
    %cst = arith.constant 2.200000e-01 : f32
    %5 = vector.broadcast %cst : f32 to vector<1x12x52xf32>
    %6 = arith.addf %4, %5 : vector<1x12x52xf32>
    %c0_8 = arith.constant 0 : index
    %c0_9 = arith.constant 0 : index
    %c0_10 = arith.constant 0 : index
    %7 = vector.load %arg3[%c0_8, %c0_9, %c0_10] : memref<1x12x1xf32, #tpu.memory_space<vmem>>, vector<1x12x1xf32>
    %cst_11 = arith.constant 1.000000e-01 : f32
    %8 = vector.broadcast %cst_11 : f32 to vector<1x12x1xf32>
    %9 = arith.mulf %7, %8 : vector<1x12x1xf32>
    %10 = vector.broadcast %9 : vector<1x12x1xf32> to vector<1x12x52xf32>
    %11 = arith.addf %6, %10 : vector<1x12x52xf32>
    %c0_12 = arith.constant 0 : index
    %c0_13 = arith.constant 0 : index
    %c0_14 = arith.constant 0 : index
    %12 = vector.load %arg4[%c0_12, %c0_13, %c0_14] : memref<1x12x52xf32, #tpu.memory_space<vmem>>, vector<1x12x52xf32>
    %cst_15 = arith.constant 5.000000e-01 : f32
    %13 = vector.broadcast %cst_15 : f32 to vector<1x12x52xf32>
    %14 = arith.mulf %12, %13 : vector<1x12x52xf32>
    %15 = arith.subf %11, %14 : vector<1x12x52xf32>
    %c0_16 = arith.constant 0 : index
    %c0_17 = arith.constant 0 : index
    %c0_18 = arith.constant 0 : index
    %16 = vector.load %arg5[%c0_16, %c0_17, %c0_18] : memref<1x12x52xf32, #tpu.memory_space<vmem>>, vector<1x12x52xf32>
    tpu.vector_store %arg5[%c0_16, %c0_17, %c0_18], %15 {strides = array<i32>} : memref<1x12x52xf32, #tpu.memory_space<vmem>>, vector<1x12x52xf32>,
    return
  }
}

</mosaic_0001>

<llo_original>
// kernel: _model_forward.1
$region0: #{_model_forward.1}
  #allocation0 [shape = 'u32[]', space=smem, size = 0x4, offset = 0x4, fixed_abs, tag = 'smem constant byte address 0x4 - core index']
  #allocation1 [shape = 'u32[144,128]{1,0:T(1,128)}', space=vmem, size = 0x12000, scoped, tag = 'internal scratch']
  %s0 = inlined_call_operand.vmem [shape: f32[1,12,52], index: 0, kind: input, shape index: {}, may-alias: {0,5}]
  %s1 = inlined_call_operand.vmem [shape: f32[1,12,52], index: 1, kind: input, shape index: {}]
  %s2 = inlined_call_operand.vmem [shape: f32[1,12,52], index: 2, kind: input, shape index: {}]
  %s3 = inlined_call_operand.vmem [shape: f32[1,12,1], index: 3, kind: input, shape index: {}]
  %s4 = inlined_call_operand.vmem [shape: f32[1,12,52], index: 4, kind: input, shape index: {}]
  %s5 = inlined_call_operand.vmem [shape: f32[1,12,52], index: 5, kind: output, shape index: {}, may-alias: {0,5}]
  %s6 = sld [smem:[#allocation0]]
  $region30: #{_model_forward.1} parent=0
    _
  %s8 = ssub.s32 1, %s6
  %s9 = scalar_select 0, %s8, %s6
  // Predicated region
  $region2: #{_model_forward.1} parent=0 // pred_check
    _
  $region3: #{_model_forward.1} parent=0 // pred_check_branch
    %11 = sbr.rel (0) target = $region5
  $region4: #{_model_forward.1} parent=0 // pred_region
    _
  $region5: #{_model_forward.1} parent=0 // pred_fallthru
    _
  // Predicated region
  $region6: #{_model_forward.1} parent=0 // pred_check
    _
  $region7: #{_model_forward.1} parent=0 // pred_check_branch
    %13 = sbr.rel (0) target = $region9
  $region8: #{_model_forward.1} parent=0 // pred_region
    _
  $region9: #{_model_forward.1} parent=0 // pred_fallthru
    _
  // Predicated region
  $region10: #{_model_forward.1} parent=0 // pred_check
    _
  $region11: #{_model_forward.1} parent=0 // pred_check_branch
    %15 = sbr.rel (0) target = $region13
  $region12: #{_model_forward.1} parent=0 // pred_region
    _
  $region13: #{_model_forward.1} parent=0 // pred_fallthru
    _
  // Predicated region
  $region14: #{_model_forward.1} parent=0 // pred_check
    _
  $region15: #{_model_forward.1} parent=0 // pred_check_branch
    %17 = sbr.rel (0) target = $region17
  $region16: #{_model_forward.1} parent=0 // pred_region
    _
  $region17: #{_model_forward.1} parent=0 // pred_fallthru
    _
  // Predicated region
  $region18: #{_model_forward.1} parent=0 // pred_check
    _
  $region19: #{_model_forward.1} parent=0 // pred_check_branch
    %19 = sbr.rel (0) target = $region21
  $region20: #{_model_forward.1} parent=0 // pred_region
    _
  $region21: #{_model_forward.1} parent=0 // pred_fallthru
    _
  %v20 = vld [vmem:[%s0] sm:$0xff]
  %v21 = vld [vmem:[%s0 + $0x8] sm:$0xf]
  %v22 = vld [vmem:[%s1] sm:$0xff]
  %v23 = vld [vmem:[%s1 + $0x8] sm:$0xf]
  %v24 = vadd.f32 %v20, %v22
  %v25 = vadd.f32 %v21, %v23
  %v26 = vld [vmem:[%s2] sm:$0xff]
  %v27 = vld [vmem:[%s2 + $0x8] sm:$0xf]
  %v28 = vadd.f32 %v24, %v26
  %v29 = vadd.f32 %v25, %v27
  %v30 = vadd.f32 %v28, 0.22
  %v31 = vadd.f32 %v29, 0.22
  %v32 = vld [vmem:[%s3] sm:$0xff]
  %v33 = vld [vmem:[%s3 + $0x8] sm:$0xf]
  %v34 = vmul.f32 %v32, 0.1
  %v35 = vmul.f32 %v33, 0.1
  %37 = vset.pattern.permute.xlu0 0
  %38 = vperm.xlu0 %37, %v34
  %v39 = vpop.permute.xlu0 %38
  %42 = vset.pattern.permute.xlu0 0
  %43 = vperm.xlu0 %42, %v35
  %v44 = vpop.permute.xlu0 %43
  %v46 = vadd.f32 %v30, %v39
  %v47 = vadd.f32 %v31, %v44
  %v48 = vld [vmem:[%s4] sm:$0xff]
  %v49 = vld [vmem:[%s4 + $0x8] sm:$0xf]
  %v50 = vmul.f32 %v48, 0.5
  %v51 = vmul.f32 %v49, 0.5
  %v52 = vsub.f32 %v46, %v50
  %v53 = vsub.f32 %v47, %v51
  %vm54 = vcmask 424960
  %55 = vst.msk [vmem:[%s5] sm:$0xff] %vm54, %v52
  %vm56 = vcmask 420864
  %57 = vst.msk [vmem:[%s5 + $0x8] sm:$0xf] %vm56, %v53
  // Predicated region
  $region22: #{_model_forward.1} parent=0 // pred_check
    _
  $region23: #{_model_forward.1} parent=0 // pred_check_branch
    %59 = sbr.rel (0) target = $region25
  $region24: #{_model_forward.1} parent=0 // pred_region
    _
  $region25: #{_model_forward.1} parent=0 // pred_fallthru
    _
  // Predicated region
  $region26: #{_model_forward.1} parent=0 // pred_check
    _
  $region27: #{_model_forward.1} parent=0 // pred_check_branch
    %61 = sbr.rel (0) target = $region29
  $region28: #{_model_forward.1} parent=0 // pred_region
    _
  $region29: #{_model_forward.1} parent=0 // pred_fallthru
    _

</llo_original>
